<compile_context>
chip_gen: v6e
topology: v6e:2x2x1
jax: 0.10.0
libtpu: 0.0.40
codegen_flags: <defaults>
</compile_context>

<pallas_src>
import functools

import jax
import jax.numpy as jnp
from jax import lax
from jax.experimental import pallas as pl
from jax.experimental.pallas import tpu as pltpu

BN_EPS = 1e-5


def _round_up(x, m):
    return ((x + m - 1) // m) * m


# --------------------------------------------------------------------------
# Kernel 1: core contraction (single K=dr*de matmul) + BatchNorm2
# --------------------------------------------------------------------------
def tucker_prefix_kernel(x_ref, w_ref, g2_ref, b2_ref, s_ref, *, b_actual):
    x = x_ref[...]                                   # (B_pad, dr*de)  bf16, pad rows = 0
    w = w_ref[...]                                   # (dr*de, de)     bf16
    second = jnp.dot(x, w, preferred_element_type=jnp.float32)   # (B_pad, de) f32
    # hidden_dropout1 p=0.0 -> identity

    # BatchNorm1d #2, training-mode biased batch statistics over the REAL batch.
    # Padded rows of `second` are exactly zero (zero rows of x), so they add 0
    # to the sums; their (0 - m)^2 contribution to the deviation sum is removed.
    b_pad = second.shape[0]
    n_pad = b_pad - b_actual                         # static python int
    inv_b = 1.0 / float(b_actual)
    m = jnp.sum(second, axis=0, keepdims=True) * inv_b
    dev2 = jnp.sum(jnp.square(second - m), axis=0, keepdims=True)
    var = jnp.maximum((dev2 - float(n_pad) * jnp.square(m)) * inv_b, 0.0)
    s_bn = (second - m) * lax.rsqrt(var + BN_EPS) * g2_ref[...] + b2_ref[...]
    # hidden_dropout2 p=0.0 -> identity

    s_ref[...] = s_bn.astype(s_ref.dtype)            # single bf16 cast, done once


# --------------------------------------------------------------------------
# Kernel 2: scores tile = sigmoid(s_bn @ E_tile.T), tiled over entities
# --------------------------------------------------------------------------
def tucker_scores_kernel(s_ref, e_ref, out_ref):
    # Contract the lane dim of both bf16 operands on the MXU, accumulate f32.
    logits = lax.dot_general(s_ref[...], e_ref[...], (((1,), (1,)), ((), ())),
                             preferred_element_type=jnp.float32)  # (B_pad, TILE)
    # sigmoid(x) = 0.5 * tanh(0.5 x) + 0.5  -> one EUP op per element.
    out_ref[...] = 0.5 * jnp.tanh(0.5 * logits) + 0.5


# --------------------------------------------------------------------------
# Wrapper
# --------------------------------------------------------------------------
def tucker_all_scores(head_idx, rel_idx, entity_emb, relation_emb, core,
                      g1, b1, g2, b2, *, tile_ne=4096):
    """TuckER all_scores forward.

    tile_ne: entity-tile rows for the score kernel; rounded to a multiple of
             128.  Default 4096 amortizes per-grid-step overhead; stays well
             under the scoped VMEM limit on v5e/v6e/v7x.
    """
    B = head_idx.shape[0]
    NE, de = entity_emb.shape
    dr = relation_emb.shape[1]
    B_pad = max(8, _round_up(B, 8))                   # f32/bf16 sublane rule

    h = jnp.take(entity_emb, head_idx, axis=0).astype(jnp.float32)    # (B, de)
    r = jnp.take(relation_emb, rel_idx, axis=0).astype(jnp.float32)   # (B, dr)

    # ---- BatchNorm1 (training-mode batch stats) in the wrapper: O(B*de) ----
    m1 = jnp.mean(h, axis=0, keepdims=True)
    v1 = jnp.mean(jnp.square(h - m1), axis=0, keepdims=True)
    h_bn = (h - m1) * lax.rsqrt(v1 + BN_EPS) * g1 + b1
    # input_dropout p=0.0 -> identity

    # Outer-product operand for the single K=dr*de contraction:
    #   x[b, k*de + i] = r[b, k] * h_bn[b, i]
    x = (r[:, :, None] * h_bn[:, None, :]).reshape(B, dr * de).astype(jnp.bfloat16)
    if B_pad != B:
        x = jnp.pad(x, ((0, B_pad - B), (0, 0)))      # zero rows -> BN2 stats unaffected

    # core[k, i, j] flattened so row (k*de + i) matches x's layout; bf16 halves
    # the dominant HBM stream of the prefix kernel.
    w = core.reshape(dr * de, de).astype(jnp.bfloat16)

    s_bn = pl.pallas_call(
        functools.partial(tucker_prefix_kernel, b_actual=B),
        out_shape=jax.ShapeDtypeStruct((B_pad, de), jnp.bfloat16),
        grid=(1,),
        in_specs=[
            pl.BlockSpec((B_pad, dr * de), lambda i: (0, 0)),
            pl.BlockSpec((dr * de, de), lambda i: (0, 0)),
            pl.BlockSpec((1, de), lambda i: (0, 0)),
            pl.BlockSpec((1, de), lambda i: (0, 0)),
        ],
        out_specs=pl.BlockSpec((B_pad, de), lambda i: (0, 0)),
        compiler_params=pltpu.CompilerParams(
            dimension_semantics=("arbitrary",)),
    )(x, w, g2.astype(jnp.float32), b2.astype(jnp.float32))

    # ---- scores: stream bf16 entity tiles, parallel grid axis (megacore) ----
    tile = _round_up(min(tile_ne, _round_up(NE, 128)), 128)
    NE_pad = _round_up(NE, tile)                      # full unmasked output stores
    grid_ne = NE_pad // tile

    e_bf16 = entity_emb.astype(jnp.bfloat16)          # halve HBM traffic of E stream
    if NE_pad != NE:
        e_bf16 = jnp.pad(e_bf16, ((0, NE_pad - NE), (0, 0)))

    cost = pl.CostEstimate(
        flops=2 * B_pad * de * NE_pad,
        transcendentals=B_pad * NE_pad,
        bytes_accessed=NE_pad * de * 2 + B_pad * NE_pad * 4 + B_pad * de * 2,
    )

    scores = pl.pallas_call(
        tucker_scores_kernel,
        out_shape=jax.ShapeDtypeStruct((B_pad, NE_pad), jnp.float32),
        grid=(grid_ne,),
        in_specs=[
            pl.BlockSpec((B_pad, de), lambda n: (0, 0)),   # s_bn (bf16) stays resident
            pl.BlockSpec((tile, de), lambda n: (n, 0)),    # E tile streamed / double-buffered
        ],
        out_specs=pl.BlockSpec((B_pad, tile), lambda n: (0, n)),  # lane-dense tile
        compiler_params=pltpu.CompilerParams(
            dimension_semantics=("parallel",)),
        cost_estimate=cost,
    )(s_bn, e_bf16)

    return scores[:B, :NE]


# --------------------------------------------------------------------------
# Pure-JAX reference (f32) for a correctness check
# --------------------------------------------------------------------------
def tucker_reference(head_idx, rel_idx, E, R, core, g1, b1, g2, b2):
    de = E.shape[1]
    dr = R.shape[1]
    h = E[head_idx]
    r = R[rel_idx]
    m1 = h.mean(0, keepdims=True)
    v1 = ((h - m1) ** 2).mean(0, keepdims=True)
    h = (h - m1) / jnp.sqrt(v1 + BN_EPS) * g1 + b1
    W = (r @ core.reshape(dr, de * de)).reshape(-1, de, de)
    s = jnp.einsum('bi,bij->bj', h, W)
    m2 = s.mean(0, keepdims=True)
    v2 = ((s - m2) ** 2).mean(0, keepdims=True)
    s = (s - m2) / jnp.sqrt(v2 + BN_EPS) * g2 + b2
    return jax.nn.sigmoid(s @ E.T)


if __name__ == "__main__":
    # Small synthetic "dataset": 256 entities, 32 relations, de=32, dr=16.
    NUM_ENTITIES, NUM_RELATIONS = 256, 32
    ENTITY_DIM, RELATION_DIM = 32, 16
    BATCH = 8
    TILE_NE = 128          # -> grid=(2,), exercises the tiled / parallel path

    key = jax.random.PRNGKey(0)
    k_e, k_r, k_c, k_h, k_rel = jax.random.split(key, 5)

    # xavier_normal_ equivalents (gain=1): std = sqrt(2 / (fan_in + fan_out))
    std_e = (2.0 / (NUM_ENTITIES + ENTITY_DIM)) ** 0.5
    std_r = (2.0 / (NUM_RELATIONS + RELATION_DIM)) ** 0.5
    entity_emb = std_e * jax.random.normal(k_e, (NUM_ENTITIES, ENTITY_DIM), jnp.float32)
    relation_emb = std_r * jax.random.normal(k_r, (NUM_RELATIONS, RELATION_DIM), jnp.float32)
    # core tensor ~ Uniform(-1, 1), shape (dr, de, de) as in the PyTorch module
    core = jax.random.uniform(k_c, (RELATION_DIM, ENTITY_DIM, ENTITY_DIM),
                              jnp.float32, -1.0, 1.0)

    # BatchNorm affine params (PyTorch default init: gamma=1, beta=0)
    g1 = jnp.ones((1, ENTITY_DIM), jnp.float32)
    b1 = jnp.zeros((1, ENTITY_DIM), jnp.float32)
    g2 = jnp.ones((1, ENTITY_DIM), jnp.float32)
    b2 = jnp.zeros((1, ENTITY_DIM), jnp.float32)

    # samples[:, 0] = head ids, samples[:, 1] = relation ids
    head_idx = jax.random.randint(k_h, (BATCH,), 0, NUM_ENTITIES, dtype=jnp.int32)
    rel_idx = jax.random.randint(k_rel, (BATCH,), 0, NUM_RELATIONS, dtype=jnp.int32)

    score_fn = jax.jit(functools.partial(tucker_all_scores, tile_ne=TILE_NE))

    scores = jax.block_until_ready(
        score_fn(head_idx, rel_idx, entity_emb, relation_emb, core, g1, b1, g2, b2))
    assert scores.shape == (BATCH, NUM_ENTITIES)
    assert bool(jnp.all(jnp.isfinite(scores)))

    ref = tucker_reference(head_idx, rel_idx, entity_emb, relation_emb, core,
                           g1, b1, g2, b2)
    max_err = float(jnp.max(jnp.abs(scores - ref)))
    assert max_err < 2e-2, f"max abs error vs reference: {max_err}"

    # Second check: batch NOT a multiple of 8 -> exercises the padding-aware
    # BatchNorm2 statistics path.
    scores5 = jax.block_until_ready(
        score_fn(head_idx[:5], rel_idx[:5], entity_emb, relation_emb, core,
                 g1, b1, g2, b2))
    ref5 = tucker_reference(head_idx[:5], rel_idx[:5], entity_emb, relation_emb,
                            core, g1, b1, g2, b2)
    max_err5 = float(jnp.max(jnp.abs(scores5 - ref5)))
    assert scores5.shape == (5, NUM_ENTITIES)
    assert max_err5 < 2e-2, f"max abs error (B=5) vs reference: {max_err5}"

    print("KERNEL_OK")
</pallas_src>

<mosaic_0001>
module attributes {stable_mosaic.version = 11 : i64} {
  func.func @tucker_prefix_kernel(%arg0: i32, %arg1: memref<8x512xbf16, #tpu.memory_space<vmem>>, %arg2: memref<512x32xbf16, #tpu.memory_space<vmem>>, %arg3: memref<1x32xf32, #tpu.memory_space<vmem>>, %arg4: memref<1x32xf32, #tpu.memory_space<vmem>>, %arg5: memref<8x32xbf16, #tpu.memory_space<vmem>>) attributes {dimension_semantics = [#tpu.dimension_semantics<arbitrary>], iteration_bounds = array<i64: 1>, scalar_prefetch = 0 : i64, scratch_operands = 0 : i64, tpu.core_type = #tpu.core_type<tc>, window_params = [{pipeline_mode = #tpu.pipeline_mode<synchronous>, transform_indices = @transform_0, window_bounds = array<i64: 8, 512>}, {pipeline_mode = #tpu.pipeline_mode<synchronous>, transform_indices = @transform_1, window_bounds = array<i64: 512, 32>}, {pipeline_mode = #tpu.pipeline_mode<synchronous>, transform_indices = @transform_2, window_bounds = array<i64: 1, 32>}, {pipeline_mode = #tpu.pipeline_mode<synchronous>, transform_indices = @transform_3, window_bounds = array<i64: 1, 32>}, {pipeline_mode = #tpu.pipeline_mode<synchronous>, transform_indices = @transform_4, window_bounds = array<i64: 8, 32>}]} {
    %c0 = arith.constant 0 : index
    %c0_0 = arith.constant 0 : index
    %0 = vector.load %arg1[%c0, %c0_0] : memref<8x512xbf16, #tpu.memory_space<vmem>>, vector<8x512xbf16>
    %c0_1 = arith.constant 0 : index
    %c0_2 = arith.constant 0 : index
    %1 = vector.load %arg2[%c0_1, %c0_2] : memref<512x32xbf16, #tpu.memory_space<vmem>>, vector<512x32xbf16>
    %cst = arith.constant dense<0.000000e+00> : vector<8x32xf32>
    %2 = tpu.matmul %0, %1, %cst {dimension_numbers = #tpu.dot_dimension_numbers<[1], [0], [0], [1], [0, 0, 1, 1], [], []>} : vector<8x512xbf16>, vector<512x32xbf16>, vector<8x32xf32> -> vector<8x32xf32>
    %cst_3 = arith.constant dense<0.000000e+00> : vector<32xf32>
    %3 = vector.multi_reduction <add>, %2, %cst_3 [0] : vector<8x32xf32> to vector<32xf32>
    %4 = vector.shape_cast %3 : vector<32xf32> to vector<1x32xf32>
    %cst_4 = arith.constant 1.250000e-01 : f32
    %5 = vector.broadcast %cst_4 : f32 to vector<1x32xf32>
    %6 = arith.mulf %4, %5 : vector<1x32xf32>
    %7 = vector.broadcast %6 : vector<1x32xf32> to vector<8x32xf32>
    %8 = arith.subf %2, %7 : vector<8x32xf32>
    %9 = arith.mulf %8, %8 : vector<8x32xf32>
    %cst_5 = arith.constant dense<0.000000e+00> : vector<32xf32>
    %10 = vector.multi_reduction <add>, %9, %cst_5 [0] : vector<8x32xf32> to vector<32xf32>
    %11 = vector.shape_cast %10 : vector<32xf32> to vector<1x32xf32>
    %12 = arith.mulf %6, %6 : vector<1x32xf32>
    %cst_6 = arith.constant 0.000000e+00 : f32
    %13 = vector.broadcast %cst_6 : f32 to vector<1x32xf32>
    %14 = arith.mulf %13, %12 : vector<1x32xf32>
    %15 = arith.subf %11, %14 : vector<1x32xf32>
    %cst_7 = arith.constant 1.250000e-01 : f32
    %16 = vector.broadcast %cst_7 : f32 to vector<1x32xf32>
    %17 = arith.mulf %15, %16 : vector<1x32xf32>
    %cst_8 = arith.constant 0.000000e+00 : f32
    %18 = vector.broadcast %cst_8 : f32 to vector<1x32xf32>
    %19 = arith.maximumf %17, %18 : vector<1x32xf32>
    %20 = vector.broadcast %6 : vector<1x32xf32> to vector<8x32xf32>
    %21 = arith.subf %2, %20 : vector<8x32xf32>
    %cst_9 = arith.constant 9.99999974E-6 : f32
    %22 = vector.broadcast %cst_9 : f32 to vector<1x32xf32>
    %23 = arith.addf %19, %22 : vector<1x32xf32>
    %24 = math.rsqrt %23 : vector<1x32xf32>
    %25 = vector.broadcast %24 : vector<1x32xf32> to vector<8x32xf32>
    %26 = arith.mulf %21, %25 : vector<8x32xf32>
    %c0_10 = arith.constant 0 : index
    %c0_11 = arith.constant 0 : index
    %27 = vector.load %arg3[%c0_10, %c0_11] : memref<1x32xf32, #tpu.memory_space<vmem>>, vector<1x32xf32>
    %28 = vector.broadcast %27 : vector<1x32xf32> to vector<8x32xf32>
    %29 = arith.mulf %26, %28 : vector<8x32xf32>
    %c0_12 = arith.constant 0 : index
    %c0_13 = arith.constant 0 : index
    %30 = vector.load %arg4[%c0_12, %c0_13] : memref<1x32xf32, #tpu.memory_space<vmem>>, vector<1x32xf32>
    %31 = vector.broadcast %30 : vector<1x32xf32> to vector<8x32xf32>
    %32 = arith.addf %29, %31 : vector<8x32xf32>
    %33 = arith.truncf %32 : vector<8x32xf32> to vector<8x32xbf16>
    %c0_14 = arith.constant 0 : index
    %c0_15 = arith.constant 0 : index
    %34 = vector.load %arg5[%c0_14, %c0_15] : memref<8x32xbf16, #tpu.memory_space<vmem>>, vector<8x32xbf16>
    tpu.vector_store %arg5[%c0_14, %c0_15], %33 {strides = array<i32>} : memref<8x32xbf16, #tpu.memory_space<vmem>>, vector<8x32xbf16>,
    return
  }
  func.func @transform_0(%arg0: i32) -> (i32, i32) {
    %c0_i32 = arith.constant 0 : i32
    %c0_i32_0 = arith.constant 0 : i32
    %c0_i32_1 = arith.constant 0 : i32
    return %c0_i32, %c0_i32_0 : i32, i32
  }
  func.func @transform_1(%arg0: i32) -> (i32, i32) {
    %c0_i32 = arith.constant 0 : i32
    %c0_i32_0 = arith.constant 0 : i32
    %c0_i32_1 = arith.constant 0 : i32
    return %c0_i32, %c0_i32_0 : i32, i32
  }
  func.func @transform_2(%arg0: i32) -> (i32, i32) {
    %c0_i32 = arith.constant 0 : i32
    %c0_i32_0 = arith.constant 0 : i32
    %c0_i32_1 = arith.constant 0 : i32
    return %c0_i32, %c0_i32_0 : i32, i32
  }
  func.func @transform_3(%arg0: i32) -> (i32, i32) {
    %c0_i32 = arith.constant 0 : i32
    %c0_i32_0 = arith.constant 0 : i32
    %c0_i32_1 = arith.constant 0 : i32
    return %c0_i32, %c0_i32_0 : i32, i32
  }
  func.func @transform_4(%arg0: i32) -> (i32, i32) {
    %c0_i32 = arith.constant 0 : i32
    %c0_i32_0 = arith.constant 0 : i32
    %c0_i32_1 = arith.constant 0 : i32
    return %c0_i32, %c0_i32_0 : i32, i32
  }
}

module attributes {stable_mosaic.version = 11 : i64} {
  func.func @tucker_scores_kernel(%arg0: i32, %arg1: memref<8x32xbf16, #tpu.memory_space<vmem>>, %arg2: memref<128x32xbf16, #tpu.memory_space<vmem>>, %arg3: memref<8x128xf32, #tpu.memory_space<vmem>>) attributes {dimension_semantics = [#tpu.dimension_semantics<parallel>], iteration_bounds = array<i64: 2>, scalar_prefetch = 0 : i64, scratch_operands = 0 : i64, tpu.core_type = #tpu.core_type<tc>, window_params = [{pipeline_mode = #tpu.pipeline_mode<synchronous>, transform_indices = @transform_0, window_bounds = array<i64: 8, 32>}, {transform_indices = @transform_1, window_bounds = array<i64: 128, 32>}, {transform_indices = @transform_2, window_bounds = array<i64: 8, 128>}]} {
    %c0 = arith.constant 0 : index
    %c0_0 = arith.constant 0 : index
    %0 = vector.load %arg1[%c0, %c0_0] : memref<8x32xbf16, #tpu.memory_space<vmem>>, vector<8x32xbf16>
    %c0_1 = arith.constant 0 : index
    %c0_2 = arith.constant 0 : index
    %1 = vector.load %arg2[%c0_1, %c0_2] : memref<128x32xbf16, #tpu.memory_space<vmem>>, vector<128x32xbf16>
    %cst = arith.constant dense<0.000000e+00> : vector<8x128xf32>
    %2 = tpu.matmul %0, %1, %cst {dimension_numbers = #tpu.dot_dimension_numbers<[1], [1], [0], [0], [0, 0, 1, 0], [], []>} : vector<8x32xbf16>, vector<128x32xbf16>, vector<8x128xf32> -> vector<8x128xf32>
    %cst_3 = arith.constant 5.000000e-01 : f32
    %3 = vector.broadcast %cst_3 : f32 to vector<8x128xf32>
    %4 = arith.mulf %3, %2 : vector<8x128xf32>
    %5 = math.tanh %4 : vector<8x128xf32>
    %cst_4 = arith.constant 5.000000e-01 : f32
    %6 = vector.broadcast %cst_4 : f32 to vector<8x128xf32>
    %7 = arith.mulf %6, %5 : vector<8x128xf32>
    %cst_5 = arith.constant 5.000000e-01 : f32
    %8 = vector.broadcast %cst_5 : f32 to vector<8x128xf32>
    %9 = arith.addf %7, %8 : vector<8x128xf32>
    %c0_6 = arith.constant 0 : index
    %c0_7 = arith.constant 0 : index
    %10 = vector.load %arg3[%c0_6, %c0_7] : memref<8x128xf32, #tpu.memory_space<vmem>>, vector<8x128xf32>
    tpu.vector_store %arg3[%c0_6, %c0_7], %9 {strides = array<i32>} : memref<8x128xf32, #tpu.memory_space<vmem>>, vector<8x128xf32>,
    return
  }
  func.func @transform_0(%arg0: i32) -> (i32, i32) {
    %c0_i32 = arith.constant 0 : i32
    %c0_i32_0 = arith.constant 0 : i32
    %c0_i32_1 = arith.constant 0 : i32
    return %c0_i32, %c0_i32_0 : i32, i32
  }
  func.func @transform_1(%arg0: i32) -> (i32, i32) {
    %c0_i32 = arith.constant 0 : i32
    %c0_i32_0 = arith.constant 0 : i32
    return %arg0, %c0_i32 : i32, i32
  }
  func.func @transform_2(%arg0: i32) -> (i32, i32) {
    %c0_i32 = arith.constant 0 : i32
    %c0_i32_0 = arith.constant 0 : i32
    return %c0_i32, %arg0 : i32, i32
  }
}

</mosaic_0001>

<llo_original>
// kernel: tucker_all_scores.3
$region0: #{tucker_all_scores.3}
  #allocation0 [shape = 'u32[]', space=smem, size = 0x4, offset = 0x4, fixed_abs, tag = 'smem constant byte address 0x4 - core index']
  #allocation1 [shape = 'u32[144,128]{1,0:T(1,128)}', space=vmem, size = 0x12000, scoped, tag = 'internal scratch']
  %s0 = inlined_call_operand.vmem [shape: bf16[8,32], index: 0, kind: input, shape index: {}]
  %s1 = inlined_call_operand.vmem [shape: bf16[256,32], index: 1, kind: input, shape index: {}]
  %s2 = inlined_call_operand.hbm [shape: f32[8,256], index: 2, kind: output, shape index: {}]
  %s3 = sld [smem:[#allocation0]]
  $region41: #{tucker_all_scores.3} parent=0
    _
  %s5 = ssub.s32 1, %s3
  %s6 = scalar_select 0, %s5, %s3
  $region1: #{tucker_all_scores.3} parent=0
    #allocation2 [shape = 'u8[8192]{0}', space=vmem, size = 0x2000, scoped, tag = 'output window, operand 0']
    #allocation3 [shape = 's32[2]{0}', space=sflag, size = 0x8, scoped, tag = 'scoped memory for tucker_all_scores.3']
    %7 = vsyncpa [#allocation3], 0
    %s8 = scalar_lea.sflag [#allocation3], 1
    %9 = vsyncpa %s8, 0
    loop: start=0, step=1, limit=4
    $region2: #{tucker_all_scores.3} parent=1 // loop_pre_header
      _
    $region3: #{tucker_all_scores.3} parent=1 // loop_header
      %s11 = sphi 0, %s15
      %p12 = scmp.ge.s32.totalorder %s11, 4
      %s19 = sphi 0, %s19
      %s21 = sphi 0, %s19
      %s22 = sphi 0, %s21
      %s36 = sphi 0, %s22
      %s42 = sphi 0, %s44
      %s45 = sphi 0, %s42
      %s46 = sphi 0, %s45
      %s62 = sphi 0, %s46
      %s68 = sphi 0, %s70
      %s71 = sphi 0, %s68
      %s72 = sphi 0, %s71
      %s88 = sphi 0, %s72
    $region4: #{tucker_all_scores.3} parent=1 // loop_header_branch
      %14 = sbr.rel (%p12) target = $region8
    $region5: #{tucker_all_scores.3} parent=1 // loop_body
      %s16 = ssub.s32 %s11, 1
      %s17 = ssub.s32 %s11, 2
      %s18 = sadd.s32 %s11, 1
      %s20 = sadd.s32 %s19, 1
      %p23 = scmp.eq.s32.totalorder %s11, 1
      %p24 = scmp.ne.s32.totalorder %s19, %s21
      %p25 = scmp.eq.s32.totalorder %s11, 0
      %p26 = por %p24, %p25
      %p27 = scmp.ne.s32.totalorder %s19, %s21
      %p28 = scmp.eq.s32.totalorder %s16, 1
      %p29 = por %p27, %p28
      %p30 = scmp.ne.s32.totalorder %s21, %s22
      %p31 = scmp.eq.s32.totalorder %s16, 0
      %p32 = por %p30, %p31
      %p33 = scmp.ne.s32.totalorder %s21, %s22
      %p34 = scmp.eq.s32.totalorder %s17, 1
      %p35 = por %p33, %p34
      %p37 = scmp.ne.s32.totalorder %s22, %s36
      %p38 = scmp.eq.s32.totalorder %s17, 0
      %p39 = por %p37, %p38
      %s40 = ssub.s32 %s11, %s18
      %p41 = scmp.eq.s32.totalorder %s40, 0
      %s43 = sadd.s32 %s42, 1
      %s44 = scalar_select %p41, %s42, %s43
      %p47 = pneg %p41
      %p48 = scmp.eq.s32.totalorder %s11, 1
      %p49 = por %p47, %p48
      %p50 = scmp.ne.s32.totalorder %s42, %s45
      %p51 = scmp.eq.s32.totalorder %s11, 0
      %p52 = por %p50, %p51
      %p53 = scmp.ne.s32.totalorder %s42, %s45
      %p54 = scmp.eq.s32.totalorder %s16, 1
      %p55 = por %p53, %p54
      %p56 = scmp.ne.s32.totalorder %s45, %s46
      %p57 = scmp.eq.s32.totalorder %s16, 0
      %p58 = por %p56, %p57
      %p59 = scmp.ne.s32.totalorder %s45, %s46
      %p60 = scmp.eq.s32.totalorder %s17, 1
      %p61 = por %p59, %p60
      %p63 = scmp.ne.s32.totalorder %s46, %s62
      %p64 = scmp.eq.s32.totalorder %s17, 0
      %p65 = por %p63, %p64
      %s66 = ssub.s32 %s11, %s18
      %p67 = scmp.eq.s32.totalorder %s66, 0
      %s69 = sadd.s32 %s68, 1
      %s70 = scalar_select %p67, %s68, %s69
      %p73 = pneg %p67
      %p74 = scmp.eq.s32.totalorder %s11, 1
      %p75 = por %p73, %p74
      %p76 = scmp.ne.s32.totalorder %s68, %s71
      %p77 = scmp.eq.s32.totalorder %s11, 0
      %p78 = por %p76, %p77
      %p79 = scmp.ne.s32.totalorder %s68, %s71
      %p80 = scmp.eq.s32.totalorder %s16, 1
      %p81 = por %p79, %p80
      %p82 = scmp.ne.s32.totalorder %s71, %s72
      %p83 = scmp.eq.s32.totalorder %s16, 0
      %p84 = por %p82, %p83
      %p85 = scmp.ne.s32.totalorder %s71, %s72
      %p86 = scmp.eq.s32.totalorder %s17, 1
      %p87 = por %p85, %p86
      %p89 = scmp.ne.s32.totalorder %s72, %s88
      %p90 = scmp.eq.s32.totalorder %s17, 0
      %p91 = por %p89, %p90
      %p92 = scmp.le.s32.totalorder 1, %s11
      %p93 = scmp.lt.s32.totalorder %s11, 3
      %p94 = pnand %p92, %p93
      %p95 = pneg %p94
      // Predicated region
      $region9: #{tucker_all_scores.3} parent=5 // pred_check
        _
      $region10: #{tucker_all_scores.3} parent=5 // pred_check_branch
        %97 = sbr.rel (%p94) target = $region12
      $region11: #{tucker_all_scores.3} parent=5 // pred_region
        %s98 = ssub.s32 %s11, 1
        // Predicated region
        $region13: #{tucker_all_scores.3} parent=11 // pred_check
          %p99 = pneg %p32
        $region14: #{tucker_all_scores.3} parent=11 // pred_check_branch
          %101 = sbr.rel (%p99) target = $region16
        $region15: #{tucker_all_scores.3} parent=11 // pred_region
          _
        $region16: #{tucker_all_scores.3} parent=11 // pred_fallthru
          _
      $region12: #{tucker_all_scores.3} parent=5 // pred_fallthru
        _
      %p102 = scmp.lt.s32.totalorder %s11, 2
      // Predicated region
      $region17: #{tucker_all_scores.3} parent=5 // pred_check
        %p103 = pneg %p102
      $region18: #{tucker_all_scores.3} parent=5 // pred_check_branch
        %105 = sbr.rel (%p103) target = $region20
      $region19: #{tucker_all_scores.3} parent=5 // pred_region
        // Predicated region
        $region21: #{tucker_all_scores.3} parent=19 // pred_check
          %p106 = pneg %p52
        $region22: #{tucker_all_scores.3} parent=19 // pred_check_branch
          %108 = sbr.rel (%p106) target = $region24
        $region23: #{tucker_all_scores.3} parent=19 // pred_region
          %s109 = smul.u32 16, %s11
          %p110 = scmp.lt.s32.totalorder %s109, 31
          %s111 = scalar_select %p110, %s109, 31
          %s112 = smul.addr %s111, 4
          %s113 = scalar_lea.vmem %s1, %s112
          %s114 = smul.u32 16, %s11
        $region24: #{tucker_all_scores.3} parent=19 // pred_fallthru
          _
      $region20: #{tucker_all_scores.3} parent=5 // pred_fallthru
        _
      %p115 = scmp.le.s32.totalorder 1, %s11
      %p116 = scmp.lt.s32.totalorder %s11, 3
      %p117 = pnand %p115, %p116
      %p118 = pneg %p117
      // Predicated region
      $region25: #{tucker_all_scores.3} parent=5 // pred_check
        _
      $region26: #{tucker_all_scores.3} parent=5 // pred_check_branch
        %120 = sbr.rel (%p117) target = $region28
      $region27: #{tucker_all_scores.3} parent=5 // pred_region
        %s121 = ssub.s32 %s11, 1
        %p122 = pneg %p32
        %p123 = pneg %p29
        %s124 = smul.u32 16, %s16
        %p125 = scmp.lt.s32.totalorder %s124, 31
        %s126 = scalar_select %p125, %s124, 31
        %s127 = smul.addr %s126, 4
        %s128 = scalar_lea.vmem %s1, %s127
        %p129 = pneg %p58
        %p130 = pneg %p55
        %p131 = pneg %p84
        %p132 = pneg %p81
        %s133 = sand.u32 %s71, 1
        %s134 = scalar_lea.sflag [#allocation3], %s133
        %s135 = sand.u32 %s71, 1
        %s136 = smul.addr %s135, 8
        %s137 = scalar_lea.vmem [#allocation2], %s136
        %s138 = smul.u32 16, %s16
        %p139 = scmp.lt.s32.totalorder %s138, 31
        %s140 = scalar_select %p139, %s138, 31
        %s141 = smul.addr %s140, 4
        %s142 = scalar_lea.vmem %s1, %s141
        %s143 = smul.u32 16, %s16
        %v145 = vld [vmem:[%s0] sm:$0xf]
        %v146 = vld [vmem:[%s142] sm:$0xf]
        %v147 = vld [vmem:[%s142 + $0x4] sm:$0xf]
        %v148 = vld [vmem:[%s142 + $0x8] sm:$0xf]
        %v149 = vld [vmem:[%s142 + $0xc] sm:$0xf]
        %v150 = vld [vmem:[%s142 + $0x10] sm:$0xf]
        %v151 = vld [vmem:[%s142 + $0x14] sm:$0xf]
        %v152 = vld [vmem:[%s142 + $0x18] sm:$0xf]
        %v153 = vld [vmem:[%s142 + $0x1c] sm:$0xf]
        %v154 = vld [vmem:[%s142 + $0x20] sm:$0xf]
        %v155 = vld [vmem:[%s142 + $0x24] sm:$0xf]
        %v156 = vld [vmem:[%s142 + $0x28] sm:$0xf]
        %v157 = vld [vmem:[%s142 + $0x2c] sm:$0xf]
        %v158 = vld [vmem:[%s142 + $0x30] sm:$0xf]
        %v159 = vld [vmem:[%s142 + $0x34] sm:$0xf]
        %v160 = vld [vmem:[%s142 + $0x38] sm:$0xf]
        %v161 = vld [vmem:[%s142 + $0x3c] sm:$0xf]
        %v178 = vunpack.c.l.b16 %v146
        %v179 = vunpack.c.l.b16 %v147
        %v180 = vunpack.c.l.b16 %v148
        %v181 = vunpack.c.l.b16 %v149
        %v182 = vunpack.c.l.b16 %v150
        %v183 = vunpack.c.l.b16 %v151
        %v184 = vunpack.c.l.b16 %v152
        %v185 = vunpack.c.l.b16 %v153
        %v186 = vunpack.c.l.b16 %v154
        %v187 = vunpack.c.l.b16 %v155
        %v188 = vunpack.c.l.b16 %v156
        %v189 = vunpack.c.l.b16 %v157
        %v190 = vunpack.c.l.b16 %v158
        %v191 = vunpack.c.l.b16 %v159
        %v192 = vunpack.c.l.b16 %v160
        %v193 = vunpack.c.l.b16 %v161
        %v194 = vpack.c.b16 %v179, %v178
        %v195 = vpack.c.b16 %v181, %v180
        %v196 = vpack.c.b16 %v183, %v182
        %v197 = vpack.c.b16 %v185, %v184
        %v198 = vpack.c.b16 %v187, %v186
        %v199 = vpack.c.b16 %v189, %v188
        %v200 = vpack.c.b16 %v191, %v190
        %v201 = vpack.c.b16 %v193, %v192
        %vm202 = vcmask 261120
        %v204 = vsel %vm202, %v145, 0
        %v207 = vsel %vm202, %v194, 0
        %v210 = vsel %vm202, %v195, 0
        %v213 = vsel %vm202, %v196, 0
        %v216 = vsel %vm202, %v197, 0
        %v219 = vsel %vm202, %v198, 0
        %v222 = vsel %vm202, %v199, 0
        %v225 = vsel %vm202, %v200, 0
        %v228 = vsel %vm202, %v201, 0
        %230 = vmatprep.subr.bf16.mxu0 0
        %231 = vmatpush1.bf16.xpose.msra.mxu0 %v228
        %232 = vmatprep.subr.bf16.mxu0 0
        %233 = vmatpush1.bf16.xpose.msra.mxu0 %v225
        %234 = vmatprep.subr.bf16.mxu0 0
        %235 = vmatpush1.bf16.xpose.msra.mxu0 %v222
        %236 = vmatprep.subr.bf16.mxu0 0
        %237 = vmatpush1.bf16.xpose.msra.mxu0 %v219
        %238 = vmatprep.subr.bf16.mxu0 0
        %239 = vmatpush1.bf16.xpose.msra.mxu0 %v216
        %240 = vmatprep.subr.bf16.mxu0 0
        %241 = vmatpush1.bf16.xpose.msra.mxu0 %v213
        %242 = vmatprep.subr.bf16.mxu0 0
        %243 = vmatpush1.bf16.xpose.msra.mxu0 %v210
        %244 = vmatprep.subr.bf16.mxu0 0
        %245 = vmatpush1.bf16.xpose.msra.mxu0 %v207
        %246 = vmatprep.subr.bf16.mxu0 0
        %247 = vmatpush2.bf16.xpose.msra.mxu0 0
        %248 = vmatprep.subr.bf16.mxu0 0
        %249 = vmatpush2.bf16.xpose.msra.mxu0 0
        %250 = vmatprep.subr.bf16.mxu0 0
        %251 = vmatpush2.bf16.xpose.msra.mxu0 0
        %252 = vmatprep.subr.bf16.mxu0 0
        %253 = vmatpush2.bf16.xpose.msra.mxu0 0
        %254 = vmatprep.subr.bf16.mxu0 0
        %255 = vmatpush2.bf16.xpose.msra.mxu0 0
        %256 = vmatprep.subr.bf16.mxu0 0
        %257 = vmatpush2.bf16.xpose.msra.mxu0 0
        %258 = vmatprep.subr.bf16.mxu0 0
        %259 = vmatpush2.bf16.xpose.msra.mxu0 0
        %260 = vmatprep.subr.bf16.mxu0 0
        %261 = vmatpush2.bf16.xpose.msra.mxu0 0
        %262 = vmatprep.mubr.bf16.mxu0 0
        %263 = vmatmul.mubr.bf16.gmra.mxu0 %v204
        %v264 = vpop.f32.mrf.mxu0
        %v265 = vadd.f32 0.0, %v264
        %v266 = vpop.f32.mrf.mxu0
        %v267 = vpop.f32.mrf.mxu0
        %v268 = vpop.f32.mrf.mxu0
        %269 = vdwg.mxu0
        %v270 = vmul.f32 %v265, 0.5
        %v271 = vtanh.pop %v270
        %v272 = vmul.f32 %v271, 0.5
        %v273 = vadd.f32 %v272, 0.5
        %274 = vst [vmem:[%s137] sm:$0xff] %v273
        %s275 = sand.u32 %s71, 1
        %s276 = scalar_lea.sflag [#allocation3], %s275
        %s277 = sand.u32 %s71, 1
        %s278 = smul.addr %s277, 8
        %s279 = scalar_lea.vmem [#allocation2], %s278
        // Predicated region
        $region29: #{tucker_all_scores.3} parent=27 // pred_check
          %p280 = pneg %p81
        $region30: #{tucker_all_scores.3} parent=27 // pred_check_branch
          %282 = sbr.rel (%p280) target = $region32
        $region31: #{tucker_all_scores.3} parent=27 // pred_region
          %s284 = ssub.s32 128, 128
          %285 = vsyncadd %s276, %s284
          %s286 = smul.addr %s16, 128
          %s287 = scalar_lea.hbm %s2, %s286
          %s289 = sshll.u32 %s279, 4
          %s290 = int_to_ptr.vmem [resolvable:$true] %s289
          %292 = dma.vmem_to_hbm [thread:$0]  %s290, 128, %s287, %s276
        $region32: #{tucker_all_scores.3} parent=27 // pred_fallthru
          _
      $region28: #{tucker_all_scores.3} parent=5 // pred_fallthru
        _
      %p293 = scmp.le.s32.totalorder 2, %s11
      // Predicated region
      $region33: #{tucker_all_scores.3} parent=5 // pred_check
        %p294 = pneg %p293
      $region34: #{tucker_all_scores.3} parent=5 // pred_check_branch
        %296 = sbr.rel (%p294) target = $region36
      $region35: #{tucker_all_scores.3} parent=5 // pred_region
        %s297 = ssub.s32 %s11, 2
        // Predicated region
        $region37: #{tucker_all_scores.3} parent=35 // pred_check
          %p298 = pneg %p87
        $region38: #{tucker_all_scores.3} parent=35 // pred_check_branch
          %300 = sbr.rel (%p298) target = $region40
        $region39: #{tucker_all_scores.3} parent=35 // pred_region
          %s301 = sand.u32 %s72, 1
          %s302 = scalar_lea.sflag [#allocation3], %s301
          %s303 = sand.u32 %s72, 1
          %s304 = smul.addr %s303, 8
          %s305 = scalar_lea.vmem [#allocation2], %s304
          %306 = dma.done %s302, 128
        $region40: #{tucker_all_scores.3} parent=35 // pred_fallthru
          _
      $region36: #{tucker_all_scores.3} parent=5 // pred_fallthru
        _
    $region6: #{tucker_all_scores.3} parent=1 // loop_footer
      %s15 = sadd.s32 1, %s11
    $region7: #{tucker_all_scores.3} parent=1 // loop_footer_branch
      %10 = sbr.rel target = $region3
    $region8: #{tucker_all_scores.3} parent=1 // loop_exit
      _
    %307 = vsyncpa [#allocation3], 1
    %s308 = scalar_lea.sflag [#allocation3], 1
    %309 = vsyncpa %s308, 1

// kernel: tucker_all_scores.2
$region0: #{tucker_all_scores.2}
  #allocation0 [shape = 'u32[]', space=smem, size = 0x4, offset = 0x4, fixed_abs, tag = 'smem constant byte address 0x4 - core index']
  #allocation1 [shape = 'u32[144,128]{1,0:T(1,128)}', space=vmem, size = 0x12000, scoped, tag = 'internal scratch']
  %s0 = inlined_call_operand.vmem [shape: bf16[8,512], index: 0, kind: input, shape index: {}]
  %s1 = inlined_call_operand.vmem [shape: bf16[512,32], index: 1, kind: input, shape index: {}]
  %s2 = inlined_call_operand.vmem [shape: f32[1,32], index: 2, kind: input, shape index: {}]
  %s3 = inlined_call_operand.vmem [shape: f32[1,32], index: 3, kind: input, shape index: {}]
  %s4 = inlined_call_operand.vmem [shape: bf16[8,32], index: 4, kind: output, shape index: {}]
  %s5 = sld [smem:[#allocation0]]
  $region26: #{tucker_all_scores.2} parent=0
    _
  %s7 = ssub.s32 1, %s5
  %s8 = scalar_select 0, %s7, %s5
  // Predicated region
  $region2: #{tucker_all_scores.2} parent=0 // pred_check
    _
  $region3: #{tucker_all_scores.2} parent=0 // pred_check_branch
    %10 = sbr.rel (0) target = $region5
  $region4: #{tucker_all_scores.2} parent=0 // pred_region
    _
  $region5: #{tucker_all_scores.2} parent=0 // pred_fallthru
    _
  // Predicated region
  $region6: #{tucker_all_scores.2} parent=0 // pred_check
    _
  $region7: #{tucker_all_scores.2} parent=0 // pred_check_branch
    %12 = sbr.rel (0) target = $region9
  $region8: #{tucker_all_scores.2} parent=0 // pred_region
    _
  $region9: #{tucker_all_scores.2} parent=0 // pred_fallthru
    _
  // Predicated region
  $region10: #{tucker_all_scores.2} parent=0 // pred_check
    _
  $region11: #{tucker_all_scores.2} parent=0 // pred_check_branch
    %14 = sbr.rel (0) target = $region13
  $region12: #{tucker_all_scores.2} parent=0 // pred_region
    _
  $region13: #{tucker_all_scores.2} parent=0 // pred_fallthru
    _
  // Predicated region
  $region14: #{tucker_all_scores.2} parent=0 // pred_check
    _
  $region15: #{tucker_all_scores.2} parent=0 // pred_check_branch
    %16 = sbr.rel (0) target = $region17
  $region16: #{tucker_all_scores.2} parent=0 // pred_region
    _
  $region17: #{tucker_all_scores.2} parent=0 // pred_fallthru
    _
  %v18 = vld [vmem:[%s0] sm:$0xff]
  %v19 = vld [vmem:[%s0 + $0x8] sm:$0xff]
  %v20 = vld [vmem:[%s1] sm:$0xf]
  %v21 = vld [vmem:[%s1 + $0x4] sm:$0xf]
  %v22 = vld [vmem:[%s1 + $0x8] sm:$0xf]
  %v23 = vld [vmem:[%s1 + $0xc] sm:$0xf]
  %v24 = vld [vmem:[%s1 + $0x10] sm:$0xf]
  %v25 = vld [vmem:[%s1 + $0x14] sm:$0xf]
  %v26 = vld [vmem:[%s1 + $0x18] sm:$0xf]
  %v27 = vld [vmem:[%s1 + $0x1c] sm:$0xf]
  %v28 = vld [vmem:[%s1 + $0x20] sm:$0xf]
  %v29 = vld [vmem:[%s1 + $0x24] sm:$0xf]
  %v30 = vld [vmem:[%s1 + $0x28] sm:$0xf]
  %v31 = vld [vmem:[%s1 + $0x2c] sm:$0xf]
  %v32 = vld [vmem:[%s1 + $0x30] sm:$0xf]
  %v33 = vld [vmem:[%s1 + $0x34] sm:$0xf]
  %v34 = vld [vmem:[%s1 + $0x38] sm:$0xf]
  %v35 = vld [vmem:[%s1 + $0x3c] sm:$0xf]
  %v36 = vld [vmem:[%s1 + $0x40] sm:$0xf]
  %v37 = vld [vmem:[%s1 + $0x44] sm:$0xf]
  %v38 = vld [vmem:[%s1 + $0x48] sm:$0xf]
  %v39 = vld [vmem:[%s1 + $0x4c] sm:$0xf]
  %v40 = vld [vmem:[%s1 + $0x50] sm:$0xf]
  %v41 = vld [vmem:[%s1 + $0x54] sm:$0xf]
  %v42 = vld [vmem:[%s1 + $0x58] sm:$0xf]
  %v43 = vld [vmem:[%s1 + $0x5c] sm:$0xf]
  %v44 = vld [vmem:[%s1 + $0x60] sm:$0xf]
  %v45 = vld [vmem:[%s1 + $0x64] sm:$0xf]
  %v46 = vld [vmem:[%s1 + $0x68] sm:$0xf]
  %v47 = vld [vmem:[%s1 + $0x6c] sm:$0xf]
  %v48 = vld [vmem:[%s1 + $0x70] sm:$0xf]
  %v49 = vld [vmem:[%s1 + $0x74] sm:$0xf]
  %v50 = vld [vmem:[%s1 + $0x78] sm:$0xf]
  %v51 = vld [vmem:[%s1 + $0x7c] sm:$0xf]
  %v52 = vld [vmem:[%s1 + $0x80] sm:$0xf]
  %v53 = vld [vmem:[%s1 + $0x84] sm:$0xf]
  %v54 = vld [vmem:[%s1 + $0x88] sm:$0xf]
  %v55 = vld [vmem:[%s1 + $0x8c] sm:$0xf]
  %v56 = vld [vmem:[%s1 + $0x90] sm:$0xf]
  %v57 = vld [vmem:[%s1 + $0x94] sm:$0xf]
  %v58 = vld [vmem:[%s1 + $0x98] sm:$0xf]
  %v59 = vld [vmem:[%s1 + $0x9c] sm:$0xf]
  %v60 = vld [vmem:[%s1 + $0xa0] sm:$0xf]
  %v61 = vld [vmem:[%s1 + $0xa4] sm:$0xf]
  %v62 = vld [vmem:[%s1 + $0xa8] sm:$0xf]
  %v63 = vld [vmem:[%s1 + $0xac] sm:$0xf]
  %v64 = vld [vmem:[%s1 + $0xb0] sm:$0xf]
  %v65 = vld [vmem:[%s1 + $0xb4] sm:$0xf]
  %v66 = vld [vmem:[%s1 + $0xb8] sm:$0xf]
  %v67 = vld [vmem:[%s1 + $0xbc] sm:$0xf]
  %v68 = vld [vmem:[%s1 + $0xc0] sm:$0xf]
  %v69 = vld [vmem:[%s1 + $0xc4] sm:$0xf]
  %v70 = vld [vmem:[%s1 + $0xc8] sm:$0xf]
  %v71 = vld [vmem:[%s1 + $0xcc] sm:$0xf]
  %v72 = vld [vmem:[%s1 + $0xd0] sm:$0xf]
  %v73 = vld [vmem:[%s1 + $0xd4] sm:$0xf]
  %v74 = vld [vmem:[%s1 + $0xd8] sm:$0xf]
  %v75 = vld [vmem:[%s1 + $0xdc] sm:$0xf]
  %v76 = vld [vmem:[%s1 + $0xe0] sm:$0xf]
  %v77 = vld [vmem:[%s1 + $0xe4] sm:$0xf]
  %v78 = vld [vmem:[%s1 + $0xe8] sm:$0xf]
  %v79 = vld [vmem:[%s1 + $0xec] sm:$0xf]
  %v80 = vld [vmem:[%s1 + $0xf0] sm:$0xf]
  %v81 = vld [vmem:[%s1 + $0xf4] sm:$0xf]
  %v82 = vld [vmem:[%s1 + $0xf8] sm:$0xf]
  %v83 = vld [vmem:[%s1 + $0xfc] sm:$0xf]
  %v86 = vunpack.c.l.b16 %v18
  %v87 = vunpack.c.h.b16 %v18
  %v88 = vunpack.c.l.b16 %v19
  %v89 = vunpack.c.h.b16 %v19
  %v90 = vpack.c.b16 %v86, %v86
  %v91 = vpack.c.b16 %v87, %v87
  %v92 = vpack.c.b16 %v88, %v88
  %v93 = vpack.c.b16 %v89, %v89
  %v162 = vunpack.c.l.b16 %v20
  %v163 = vunpack.c.l.b16 %v21
  %v164 = vunpack.c.l.b16 %v22
  %v165 = vunpack.c.l.b16 %v23
  %v166 = vunpack.c.l.b16 %v24
  %v167 = vunpack.c.l.b16 %v25
  %v168 = vunpack.c.l.b16 %v26
  %v169 = vunpack.c.l.b16 %v27
  %v170 = vunpack.c.l.b16 %v28
  %v171 = vunpack.c.l.b16 %v29
  %v172 = vunpack.c.l.b16 %v30
  %v173 = vunpack.c.l.b16 %v31
  %v174 = vunpack.c.l.b16 %v32
  %v175 = vunpack.c.l.b16 %v33
  %v176 = vunpack.c.l.b16 %v34
  %v177 = vunpack.c.l.b16 %v35
  %v178 = vunpack.c.l.b16 %v36
  %v179 = vunpack.c.l.b16 %v37
  %v180 = vunpack.c.l.b16 %v38
  %v181 = vunpack.c.l.b16 %v39
  %v182 = vunpack.c.l.b16 %v40
  %v183 = vunpack.c.l.b16 %v41
  %v184 = vunpack.c.l.b16 %v42
  %v185 = vunpack.c.l.b16 %v43
  %v186 = vunpack.c.l.b16 %v44
  %v187 = vunpack.c.l.b16 %v45
  %v188 = vunpack.c.l.b16 %v46
  %v189 = vunpack.c.l.b16 %v47
  %v190 = vunpack.c.l.b16 %v48
  %v191 = vunpack.c.l.b16 %v49
  %v192 = vunpack.c.l.b16 %v50
  %v193 = vunpack.c.l.b16 %v51
  %v194 = vunpack.c.l.b16 %v52
  %v195 = vunpack.c.l.b16 %v53
  %v196 = vunpack.c.l.b16 %v54
  %v197 = vunpack.c.l.b16 %v55
  %v198 = vunpack.c.l.b16 %v56
  %v199 = vunpack.c.l.b16 %v57
  %v200 = vunpack.c.l.b16 %v58
  %v201 = vunpack.c.l.b16 %v59
  %v202 = vunpack.c.l.b16 %v60
  %v203 = vunpack.c.l.b16 %v61
  %v204 = vunpack.c.l.b16 %v62
  %v205 = vunpack.c.l.b16 %v63
  %v206 = vunpack.c.l.b16 %v64
  %v207 = vunpack.c.l.b16 %v65
  %v208 = vunpack.c.l.b16 %v66
  %v209 = vunpack.c.l.b16 %v67
  %v210 = vunpack.c.l.b16 %v68
  %v211 = vunpack.c.l.b16 %v69
  %v212 = vunpack.c.l.b16 %v70
  %v213 = vunpack.c.l.b16 %v71
  %v214 = vunpack.c.l.b16 %v72
  %v215 = vunpack.c.l.b16 %v73
  %v216 = vunpack.c.l.b16 %v74
  %v217 = vunpack.c.l.b16 %v75
  %v218 = vunpack.c.l.b16 %v76
  %v219 = vunpack.c.l.b16 %v77
  %v220 = vunpack.c.l.b16 %v78
  %v221 = vunpack.c.l.b16 %v79
  %v222 = vunpack.c.l.b16 %v80
  %v223 = vunpack.c.l.b16 %v81
  %v224 = vunpack.c.l.b16 %v82
  %v225 = vunpack.c.l.b16 %v83
  %v226 = vpack.c.b16 %v163, %v162
  %v227 = vpack.c.b16 %v165, %v164
  %v228 = vpack.c.b16 %v167, %v166
  %v229 = vpack.c.b16 %v169, %v168
  %v230 = vpack.c.b16 %v171, %v170
  %v231 = vpack.c.b16 %v173, %v172
  %v232 = vpack.c.b16 %v175, %v174
  %v233 = vpack.c.b16 %v177, %v176
  %v234 = vpack.c.b16 %v179, %v178
  %v235 = vpack.c.b16 %v181, %v180
  %v236 = vpack.c.b16 %v183, %v182
  %v237 = vpack.c.b16 %v185, %v184
  %v238 = vpack.c.b16 %v187, %v186
  %v239 = vpack.c.b16 %v189, %v188
  %v240 = vpack.c.b16 %v191, %v190
  %v241 = vpack.c.b16 %v193, %v192
  %v242 = vpack.c.b16 %v195, %v194
  %v243 = vpack.c.b16 %v197, %v196
  %v244 = vpack.c.b16 %v199, %v198
  %v245 = vpack.c.b16 %v201, %v200
  %v246 = vpack.c.b16 %v203, %v202
  %v247 = vpack.c.b16 %v205, %v204
  %v248 = vpack.c.b16 %v207, %v206
  %v249 = vpack.c.b16 %v209, %v208
  %v250 = vpack.c.b16 %v211, %v210
  %v251 = vpack.c.b16 %v213, %v212
  %v252 = vpack.c.b16 %v215, %v214
  %v253 = vpack.c.b16 %v217, %v216
  %v254 = vpack.c.b16 %v219, %v218
  %v255 = vpack.c.b16 %v221, %v220
  %v256 = vpack.c.b16 %v223, %v222
  %v257 = vpack.c.b16 %v225, %v224
  %290 = vmatprep.subr.bf16.mxu0 0
  %291 = vmatpush1.bf16.msra.mxu0 %v233
  %292 = vmatprep.subr.bf16.mxu0 0
  %293 = vmatpush1.bf16.msra.mxu0 %v232
  %294 = vmatprep.subr.bf16.mxu0 0
  %295 = vmatpush1.bf16.msra.mxu0 %v231
  %296 = vmatprep.subr.bf16.mxu0 0
  %297 = vmatpush1.bf16.msra.mxu0 %v230
  %298 = vmatprep.subr.bf16.mxu0 0
  %299 = vmatpush1.bf16.msra.mxu0 %v229
  %300 = vmatprep.subr.bf16.mxu0 0
  %301 = vmatpush1.bf16.msra.mxu0 %v228
  %302 = vmatprep.subr.bf16.mxu0 0
  %303 = vmatpush1.bf16.msra.mxu0 %v227
  %304 = vmatprep.subr.bf16.mxu0 0
  %305 = vmatpush1.bf16.msra.mxu0 %v226
  %306 = vmatprep.subr.bf16.mxu0 0
  %307 = vmatpush2.bf16.msra.mxu0 %v241
  %308 = vmatprep.subr.bf16.mxu0 0
  %309 = vmatpush2.bf16.msra.mxu0 %v240
  %310 = vmatprep.subr.bf16.mxu0 0
  %311 = vmatpush2.bf16.msra.mxu0 %v239
  %312 = vmatprep.subr.bf16.mxu0 0
  %313 = vmatpush2.bf16.msra.mxu0 %v238
  %314 = vmatprep.subr.bf16.mxu0 0
  %315 = vmatpush2.bf16.msra.mxu0 %v237
  %316 = vmatprep.subr.bf16.mxu0 0
  %317 = vmatpush2.bf16.msra.mxu0 %v236
  %318 = vmatprep.subr.bf16.mxu0 0
  %319 = vmatpush2.bf16.msra.mxu0 %v235
  %320 = vmatprep.subr.bf16.mxu0 0
  %321 = vmatpush2.bf16.msra.mxu0 %v234
  %322 = vmatprep.mubr.bf16.mxu0 %v91
  %323 = vmatmul.mubr.bf16.gmra.mxu0 %v90
  %v324 = vpop.f32.mrf.mxu0
  %v325 = vadd.f32 0.0, %v324
  %v326 = vpop.f32.mrf.mxu0
  %v327 = vpop.f32.mrf.mxu0
  %v328 = vpop.f32.mrf.mxu0
  %329 = vdwg.mxu0
  %330 = vmatprep.subr.bf16.mxu0 0
  %331 = vmatpush1.bf16.msra.mxu0 %v249
  %332 = vmatprep.subr.bf16.mxu0 0
  %333 = vmatpush1.bf16.msra.mxu0 %v248
  %334 = vmatprep.subr.bf16.mxu0 0
  %335 = vmatpush1.bf16.msra.mxu0 %v247
  %336 = vmatprep.subr.bf16.mxu0 0
  %337 = vmatpush1.bf16.msra.mxu0 %v246
  %338 = vmatprep.subr.bf16.mxu0 0
  %339 = vmatpush1.bf16.msra.mxu0 %v245
  %340 = vmatprep.subr.bf16.mxu0 0
  %341 = vmatpush1.bf16.msra.mxu0 %v244
  %342 = vmatprep.subr.bf16.mxu0 0
  %343 = vmatpush1.bf16.msra.mxu0 %v243
  %344 = vmatprep.subr.bf16.mxu0 0
  %345 = vmatpush1.bf16.msra.mxu0 %v242
  %346 = vmatprep.subr.bf16.mxu0 0
  %347 = vmatpush2.bf16.msra.mxu0 %v257
  %348 = vmatprep.subr.bf16.mxu0 0
  %349 = vmatpush2.bf16.msra.mxu0 %v256
  %350 = vmatprep.subr.bf16.mxu0 0
  %351 = vmatpush2.bf16.msra.mxu0 %v255
  %352 = vmatprep.subr.bf16.mxu0 0
  %353 = vmatpush2.bf16.msra.mxu0 %v254
  %354 = vmatprep.subr.bf16.mxu0 0
  %355 = vmatpush2.bf16.msra.mxu0 %v253
  %356 = vmatprep.subr.bf16.mxu0 0
  %357 = vmatpush2.bf16.msra.mxu0 %v252
  %358 = vmatprep.subr.bf16.mxu0 0
  %359 = vmatpush2.bf16.msra.mxu0 %v251
  %360 = vmatprep.subr.bf16.mxu0 0
  %361 = vmatpush2.bf16.msra.mxu0 %v250
  %362 = vmatprep.mubr.bf16.mxu0 %v93
  %363 = vmatmul.mubr.bf16.gmra.mxu0 %v92
  %v364 = vpop.f32.mrf.mxu0
  %v365 = vadd.f32 %v325, %v364
  %v366 = vpop.f32.mrf.mxu0
  %v367 = vpop.f32.mrf.mxu0
  %v368 = vpop.f32.mrf.mxu0
  %369 = vdwg.mxu0
  %vm370 = vcmask 261120
  %v371 = vsel %vm370, %v365, 0.0
  %v372 = vrot.slane %v371, 4
  %v373 = vadd.f32 %v371, %v372
  %v374 = vrot.slane %v373, 2
  %v375 = vadd.f32 %v373, %v374
  %v376 = vrot.slane %v375, 1
  %v377 = vadd.f32 %v375, %v376
  %v378 = vmul.f32 %v377, 0.125
  %v379 = vsub.f32 %v365, %v378
  %v380 = vmul.f32 %v379, %v379
  %v381 = vsel %vm370, %v380, 0.0
  %v382 = vrot.slane %v381, 4
  %v383 = vadd.f32 %v381, %v382
  %v384 = vrot.slane %v383, 2
  %v385 = vadd.f32 %v383, %v384
  %v386 = vrot.slane %v385, 1
  %v387 = vadd.f32 %v385, %v386
  %v388 = vmul.f32 %v378, %v378
  %v389 = vmul.f32 %v388, 0.0
  %v390 = vsub.f32 %v387, %v389
  %v391 = vmul.f32 %v390, 0.125
  %v392 = vmax.f32 %v391, 0.0
  %v393 = vadd.f32 %v392, 1e-05
  %v394 = vrsqrt.pop %v393
  %v395 = vmul.f32 %v379, %v394
  %v396 = vld [vmem:[%s2] sm:$0x1]
  %v398 = vlaneseq
  %v399 = vshrl.u32 %v398, 7
  %v400 = vsub.s32 0, %v399
  %v401 = vrot.slane %v396, %v400
  %v403 = vmul.f32 %v395, %v401
  %v404 = vld [vmem:[%s3] sm:$0x1]
  %v406 = vlaneseq
  %v407 = vshrl.u32 %v406, 7
  %v408 = vsub.s32 0, %v407
  %v409 = vrot.slane %v404, %v408
  %v411 = vadd.f32 %v403, %v409
  %v412 = vpack.c.bf16 %v411, %v411
  %vm413 = vcmask 257024
  %414 = vst.msk [vmem:[%s4] sm:$0xf] %vm413, %v412
  // Predicated region
  $region18: #{tucker_all_scores.2} parent=0 // pred_check
    _
  $region19: #{tucker_all_scores.2} parent=0 // pred_check_branch
    %416 = sbr.rel (0) target = $region21
  $region20: #{tucker_all_scores.2} parent=0 // pred_region
    _
  $region21: #{tucker_all_scores.2} parent=0 // pred_fallthru
    _
  // Predicated region
  $region22: #{tucker_all_scores.2} parent=0 // pred_check
    _
  $region23: #{tucker_all_scores.2} parent=0 // pred_check_branch
    %418 = sbr.rel (0) target = $region25
  $region24: #{tucker_all_scores.2} parent=0 // pred_region
    _
  $region25: #{tucker_all_scores.2} parent=0 // pred_fallthru
    _

</llo_original>
